<compile_context>
chip_gen: v6e
topology: v6e:2x2x1
jax: 0.10.0
libtpu: 0.0.40
codegen_flags: <defaults>
</compile_context>

<pallas_src>
import jax
import jax.numpy as jnp
import numpy as np
from jax.experimental import pallas as pl
from jax.experimental.pallas import tpu as pltpu

BN_EPS = 1.1e-05
_LANE = 128


def _round_down(x, m):
    return (x // m) * m


def _vmem_capacity_bytes():
    try:
        return int(pltpu.get_tpu_info().vmem_capacity_bytes)
    except Exception:
        return 64 * 1024 * 1024  # conservative fallback (v7x per-TC capacity)


# ----------------------------- Pass 1: stats ---------------------------------
def _make_stats_kernel(per_batch, hw, mt, ragged):
    def kernel(x_ref, sum_ref, gram_ref):
        if per_batch:
            first = pl.program_id(1) == 0
        else:
            first = (pl.program_id(0) == 0) & (pl.program_id(1) == 0)

        @pl.when(first)
        def _init():
            sum_ref[...] = jnp.zeros_like(sum_ref)
            gram_ref[...] = jnp.zeros_like(gram_ref)

        x = x_ref[...]                                        # (C_in, mt)
        if ragged:
            # Mask out-of-range lanes of the boundary block (their content is
            # undefined) so they contribute nothing to sum / Gram.
            off = pl.program_id(1) * mt
            lane = jax.lax.broadcasted_iota(jnp.int32, x.shape, 1)
            x = jnp.where(off + lane < hw, x, jnp.zeros_like(x))

        # Per-channel sum as an MXU matvec against a ones column: no f32 tile
        # copy, no XLU cross-lane reduction -> pass 1 is pure MXU + DMA.
        ones_col = jnp.ones((x.shape[1], 1), dtype=x.dtype)
        sum_ref[...] += jax.lax.dot_general(
            x, ones_col, (((1,), (0,)), ((), ())),
            preferred_element_type=jnp.float32)               # (C_in, 1) f32
        # NT matmul on the MXU: contract the lane (mt) axis of both operands.
        gram_ref[...] += jax.lax.dot_general(
            x, x, (((1,), (1,)), ((), ())),
            preferred_element_type=jnp.float32)               # (C_in, C_in) f32

    return kernel


# -------------------- Pass 2: conv + folded BN + ReLU -------------------------
def _make_apply_kernel(matmul_dtype):
    def kernel(x_ref, w_ref, scale_ref, shift_ref, o_ref):
        x = x_ref[...]
        if matmul_dtype is not None and x.dtype != matmul_dtype:
            x = x.astype(matmul_dtype)          # per-tile cast, no extra HBM traffic
        y = jnp.dot(w_ref[...], x,
                    preferred_element_type=jnp.float32)       # (C_out, mt) f32
        out = y * scale_ref[...] + shift_ref[...]             # (C_out, 1) broadcast
        o_ref[...] = jnp.maximum(out, 0.0).astype(o_ref.dtype)

    return kernel


# --------------------------------- Wrapper ------------------------------------
def conv1x1_bn_relu(x_nchw, weight, gamma, beta, *, eps=BN_EPS,
                    matmul_dtype=jnp.bfloat16, out_dtype=None, m_tile=None):
    """1x1 conv (no bias) + BatchNorm2d (batch stats) + ReLU.

    x_nchw: (N, C_in, H, W); weight: (C_out, C_in); gamma/beta: (C_out,).
    `matmul_dtype` is the MXU operand dtype (cast per-tile in-kernel; None keeps
    the native dtype).  `out_dtype` defaults to x's dtype; pass jnp.bfloat16 to
    halve the Y store stream.
    """
    n, c_in, h, w = x_nchw.shape
    c_out = weight.shape[0]
    hw = h * w
    m_total = n * hw
    out_dtype = x_nchw.dtype if out_dtype is None else out_dtype

    # NCHW -> (N, C_in, H*W): pure reshape (channels on sublanes, H*W on lanes).
    x3d = x_nchw.reshape(n, c_in, hw)
    w_mm = weight if matmul_dtype is None else weight.astype(matmul_dtype)

    # ---- Per-generation sizing: VMEM limit + lane tile from a byte budget. ----
    vmem_cap = _vmem_capacity_bytes()
    vmem_limit = int(min(max(vmem_cap // 2, 32 * 1024 * 1024), 96 * 1024 * 1024))
    x_bytes = jnp.dtype(x3d.dtype).itemsize
    o_bytes = jnp.dtype(out_dtype).itemsize
    if m_tile is None:
        fixed = (c_out * c_in * jnp.dtype(w_mm.dtype).itemsize    # resident weight
                 + c_in * c_in * 4 + c_in * 4                     # Gram + sum accum
                 + 2 * c_out * 4                                  # scale / shift
                 + 2 * 1024 * 1024)                               # scratch slack
        per_lane = 2 * (c_in * x_bytes + c_out * o_bytes)         # dbl-buffered X + Y
        m_tile = max((vmem_limit - fixed) // per_lane, _LANE)
    mt = min(max(_round_down(int(m_tile), _LANE), _LANE), 4096)
    # Keep blocks within the array extent; the ragged tail is handled by the
    # in-kernel mask (stats) / masked partial stores (apply).
    mt = hw if hw < _LANE else min(mt, _round_down(hw, _LANE))

    num_tiles = int(pl.cdiv(hw, mt))
    ragged = (hw % mt) != 0
    grid = (n, num_tiles)

    # Pass-1 two-TensorCore split (v7x): per-batch partial accumulators when the
    # extra (N, C_in, C_in) writeback is cheap; otherwise a shared accumulator.
    per_batch = (n >= 2) and (n * (c_in * c_in + c_in) * 4 <= 4 * 1024 * 1024)
    # TODO(synk): a tile-axis split would also cover n == 1 on v7x.

    # ---- Pass 1: tiled reduction for sum_x and the Gram matrix. ----
    stats_kernel = _make_stats_kernel(per_batch, hw, mt, ragged)
    if per_batch:
        stats_out_shape = (jax.ShapeDtypeStruct((n, c_in, 1), jnp.float32),
                           jax.ShapeDtypeStruct((n, c_in, c_in), jnp.float32))
        stats_out_specs = (pl.BlockSpec((None, c_in, 1), lambda b, t: (b, 0, 0)),
                           pl.BlockSpec((None, c_in, c_in), lambda b, t: (b, 0, 0)))
        stats_sem = ("parallel", "arbitrary")
    else:
        stats_out_shape = (jax.ShapeDtypeStruct((c_in, 1), jnp.float32),
                           jax.ShapeDtypeStruct((c_in, c_in), jnp.float32))
        stats_out_specs = (pl.BlockSpec((c_in, 1), lambda b, t: (0, 0)),
                           pl.BlockSpec((c_in, c_in), lambda b, t: (0, 0)))
        stats_sem = ("arbitrary", "arbitrary")

    sum_x, gram = pl.pallas_call(
        stats_kernel,
        out_shape=stats_out_shape,
        grid=grid,
        in_specs=[pl.BlockSpec((None, c_in, mt), lambda b, t: (b, 0, t))],
        out_specs=stats_out_specs,
        compiler_params=pltpu.CompilerParams(
            dimension_semantics=stats_sem, vmem_limit_bytes=vmem_limit),
    )(x3d)
    if per_batch:
        sum_x = jnp.sum(sum_x, axis=0)                                   # (C_in, 1)
        gram = jnp.sum(gram, axis=0)                                     # (C_in, C_in)

    # ---- Tiny O(C^2) f32 epilogue: fold BN into per-channel scale/shift. ----
    w32 = weight.astype(jnp.float32)
    inv_m = jnp.float32(1.0 / m_total)
    mean_x = sum_x * inv_m                                               # (C_in, 1)
    mean_y = jnp.dot(w32, mean_x, precision=jax.lax.Precision.HIGHEST)   # (C_out, 1)
    wg = jnp.dot(w32, gram, precision=jax.lax.Precision.HIGHEST)         # (C_out, C_in)
    e_y2 = jnp.sum(wg * w32, axis=1, keepdims=True) * inv_m
    var = jnp.maximum(e_y2 - mean_y * mean_y, 0.0)    # biased var (BN normalization)
    scale = gamma.astype(jnp.float32).reshape(c_out, 1) * jax.lax.rsqrt(var + eps)
    shift = beta.astype(jnp.float32).reshape(c_out, 1) - mean_y * scale

    # ---- Pass 2: conv + folded BN + ReLU over fully parallel tiles. ----
    # TODO(synk): sweep pl.Buffered(3) on the streaming X spec once the VMEM
    # budget above is validated per generation.
    y3d = pl.pallas_call(
        _make_apply_kernel(matmul_dtype),
        out_shape=jax.ShapeDtypeStruct((n, c_out, hw), out_dtype),
        grid=grid,
        in_specs=[
            pl.BlockSpec((None, c_in, mt), lambda b, t: (b, 0, t)),
            pl.BlockSpec((c_out, c_in), lambda b, t: (0, 0)),
            pl.BlockSpec((c_out, 1), lambda b, t: (0, 0)),
            pl.BlockSpec((c_out, 1), lambda b, t: (0, 0)),
        ],
        out_specs=pl.BlockSpec((None, c_out, mt), lambda b, t: (b, 0, t)),
        compiler_params=pltpu.CompilerParams(
            dimension_semantics=("parallel", "parallel"),
            vmem_limit_bytes=vmem_limit),
    )(x3d, w_mm, scale, shift)

    return y3d.reshape(n, c_out, h, w)


# -------------------------------- Reference -----------------------------------
def _reference(x_nchw, weight, gamma, beta, eps=BN_EPS):
    y = jnp.einsum("nchw,oc->nohw", x_nchw, weight,
                   precision=jax.lax.Precision.HIGHEST)
    mean = jnp.mean(y, axis=(0, 2, 3), keepdims=True)
    var = jnp.mean((y - mean) ** 2, axis=(0, 2, 3), keepdims=True)
    y = (y - mean) / jnp.sqrt(var + eps)
    y = y * gamma[None, :, None, None] + beta[None, :, None, None]
    return jnp.maximum(y, 0.0)


if __name__ == "__main__":
    key = jax.random.PRNGKey(0)

    def _make_inputs(k, n, c_in, c_out, h, w):
        k_x, k_w = jax.random.split(k)
        x = jax.random.normal(k_x, (n, c_in, h, w), dtype=jnp.float32)
        bound = 1.0 / np.sqrt(c_in)   # Conv2d default init bound (kernel_size=1)
        weight = jax.random.uniform(k_w, (c_out, c_in), minval=-bound,
                                    maxval=bound, dtype=jnp.float32)
        gamma = jnp.ones((c_out,), dtype=jnp.float32)   # BN affine defaults
        beta = jnp.zeros((c_out,), dtype=jnp.float32)
        return x, weight, gamma, beta

    k1, k2 = jax.random.split(key)

    # --- Case 1: module-sized shapes (2,4,16,16); strict f32 check, then the
    #     default bf16-MXU path against a bf16-rounded-input reference. ---
    x, weight, gamma, beta = _make_inputs(k1, 2, 4, 8, 16, 16)

    out_f32 = jax.block_until_ready(
        conv1x1_bn_relu(x, weight, gamma, beta, matmul_dtype=None))
    ref_f32 = _reference(x, weight, gamma, beta)
    np.testing.assert_allclose(np.asarray(out_f32), np.asarray(ref_f32),
                               rtol=1e-4, atol=1e-4)

    out_bf16 = jax.block_until_ready(
        conv1x1_bn_relu(x, weight, gamma, beta))   # default matmul_dtype=bf16
    ref_bf16 = _reference(x.astype(jnp.bfloat16).astype(jnp.float32),
                          weight.astype(jnp.bfloat16).astype(jnp.float32),
                          gamma, beta)
    np.testing.assert_allclose(np.asarray(out_bf16), np.asarray(ref_bf16),
                               rtol=5e-2, atol=5e-2)

    # --- Case 2: ragged H*W (15x15 -> 225) exercising the in-kernel lane mask
    #     and masked partial stores (no pad / no slice), plus odd channel dims. ---
    x2, w2, g2, b2 = _make_inputs(k2, 1, 3, 5, 15, 15)
    out2 = jax.block_until_ready(
        conv1x1_bn_relu(x2, w2, g2, b2, matmul_dtype=None))
    ref2 = _reference(x2, w2, g2, b2)
    np.testing.assert_allclose(np.asarray(out2), np.asarray(ref2),
                               rtol=1e-4, atol=1e-4)

    print("KERNEL_OK")
</pallas_src>

<mosaic_0001>
module attributes {stable_mosaic.version = 11 : i64} {
  func.func @kernel(%arg0: i32, %arg1: i32, %arg2: memref<1x4x256xf32, #tpu.memory_space<vmem>>, %arg3: memref<1x4x1xf32, #tpu.memory_space<vmem>>, %arg4: memref<1x4x4xf32, #tpu.memory_space<vmem>>) attributes {dimension_semantics = [#tpu.dimension_semantics<parallel>, #tpu.dimension_semantics<arbitrary>], iteration_bounds = array<i64: 2, 1>, scalar_prefetch = 0 : i64, scratch_operands = 0 : i64, tpu.core_type = #tpu.core_type<tc>, window_params = [{transform_indices = @transform_0, window_bounds = array<i64: 1, 4, 256>}, {transform_indices = @transform_1, window_bounds = array<i64: 1, 4, 1>}, {transform_indices = @transform_2, window_bounds = array<i64: 1, 4, 4>}]} {
    %c0_i32 = arith.constant 0 : i32
    %0 = arith.cmpi eq, %arg1, %c0_i32 : i32
    %1 = arith.extui %0 : i1 to i32
    %c0_i32_0 = arith.constant 0 : i32
    %2 = arith.cmpi ne, %1, %c0_i32_0 : i32
    scf.if %2 {
      %cst_17 = arith.constant 0.000000e+00 : f32
      %20 = vector.broadcast %cst_17 : f32 to vector<4x1xf32>
      %c0_18 = arith.constant 0 : index
      %c0_19 = arith.constant 0 : index
      %c0_20 = arith.constant 0 : index
      %21 = vector.load %arg3[%c0_18, %c0_19, %c0_20] : memref<1x4x1xf32, #tpu.memory_space<vmem>>, vector<1x4x1xf32>
      %22 = vector.shape_cast %21 : vector<1x4x1xf32> to vector<4x1xf32>
      %23 = vector.shape_cast %20 : vector<4x1xf32> to vector<1x4x1xf32>
      tpu.vector_store %arg3[%c0_18, %c0_19, %c0_20], %23 {strides = array<i32>} : memref<1x4x1xf32, #tpu.memory_space<vmem>>, vector<1x4x1xf32>,
      %cst_21 = arith.constant 0.000000e+00 : f32
      %24 = vector.broadcast %cst_21 : f32 to vector<4x4xf32>
      %c0_22 = arith.constant 0 : index
      %c0_23 = arith.constant 0 : index
      %c0_24 = arith.constant 0 : index
      %25 = vector.load %arg4[%c0_22, %c0_23, %c0_24] : memref<1x4x4xf32, #tpu.memory_space<vmem>>, vector<1x4x4xf32>
      %26 = vector.shape_cast %25 : vector<1x4x4xf32> to vector<4x4xf32>
      %27 = vector.shape_cast %24 : vector<4x4xf32> to vector<1x4x4xf32>
      tpu.vector_store %arg4[%c0_22, %c0_23, %c0_24], %27 {strides = array<i32>} : memref<1x4x4xf32, #tpu.memory_space<vmem>>, vector<1x4x4xf32>,
    } else {
    }
    %c0 = arith.constant 0 : index
    %c0_1 = arith.constant 0 : index
    %c0_2 = arith.constant 0 : index
    %3 = vector.load %arg2[%c0, %c0_1, %c0_2] : memref<1x4x256xf32, #tpu.memory_space<vmem>>, vector<1x4x256xf32>
    %4 = vector.shape_cast %3 : vector<1x4x256xf32> to vector<4x256xf32>
    %cst = arith.constant 1.000000e+00 : f32
    %5 = vector.broadcast %cst : f32 to vector<256x1xf32>
    %c0_3 = arith.constant 0 : index
    %c0_4 = arith.constant 0 : index
    %c0_5 = arith.constant 0 : index
    %6 = vector.load %arg3[%c0_3, %c0_4, %c0_5] : memref<1x4x1xf32, #tpu.memory_space<vmem>>, vector<1x4x1xf32>
    %7 = vector.shape_cast %6 : vector<1x4x1xf32> to vector<4x1xf32>
    %cst_6 = arith.constant dense<0.000000e+00> : vector<4x1xf32>
    %8 = tpu.matmul %4, %5, %cst_6 {dimension_numbers = #tpu.dot_dimension_numbers<[1], [0], [0], [1], [0, 0, 1, 1], [], []>} : vector<4x256xf32>, vector<256x1xf32>, vector<4x1xf32> -> vector<4x1xf32>
    %9 = arith.addf %7, %8 : vector<4x1xf32>
    %c0_7 = arith.constant 0 : index
    %c0_8 = arith.constant 0 : index
    %c0_9 = arith.constant 0 : index
    %10 = vector.load %arg3[%c0_7, %c0_8, %c0_9] : memref<1x4x1xf32, #tpu.memory_space<vmem>>, vector<1x4x1xf32>
    %11 = vector.shape_cast %10 : vector<1x4x1xf32> to vector<4x1xf32>
    %12 = vector.shape_cast %9 : vector<4x1xf32> to vector<1x4x1xf32>
    tpu.vector_store %arg3[%c0_7, %c0_8, %c0_9], %12 {strides = array<i32>} : memref<1x4x1xf32, #tpu.memory_space<vmem>>, vector<1x4x1xf32>,
    %c0_10 = arith.constant 0 : index
    %c0_11 = arith.constant 0 : index
    %c0_12 = arith.constant 0 : index
    %13 = vector.load %arg4[%c0_10, %c0_11, %c0_12] : memref<1x4x4xf32, #tpu.memory_space<vmem>>, vector<1x4x4xf32>
    %14 = vector.shape_cast %13 : vector<1x4x4xf32> to vector<4x4xf32>
    %cst_13 = arith.constant dense<0.000000e+00> : vector<4x4xf32>
    %15 = tpu.matmul %4, %4, %cst_13 {dimension_numbers = #tpu.dot_dimension_numbers<[1], [1], [0], [0], [0, 0, 1, 0], [], []>} : vector<4x256xf32>, vector<4x256xf32>, vector<4x4xf32> -> vector<4x4xf32>
    %16 = arith.addf %14, %15 : vector<4x4xf32>
    %c0_14 = arith.constant 0 : index
    %c0_15 = arith.constant 0 : index
    %c0_16 = arith.constant 0 : index
    %17 = vector.load %arg4[%c0_14, %c0_15, %c0_16] : memref<1x4x4xf32, #tpu.memory_space<vmem>>, vector<1x4x4xf32>
    %18 = vector.shape_cast %17 : vector<1x4x4xf32> to vector<4x4xf32>
    %19 = vector.shape_cast %16 : vector<4x4xf32> to vector<1x4x4xf32>
    tpu.vector_store %arg4[%c0_14, %c0_15, %c0_16], %19 {strides = array<i32>} : memref<1x4x4xf32, #tpu.memory_space<vmem>>, vector<1x4x4xf32>,
    return
  }
  func.func @transform_0(%arg0: i32, %arg1: i32) -> (i32, i32, i32) {
    %c0_i32 = arith.constant 0 : i32
    %c0_i32_0 = arith.constant 0 : i32
    return %arg0, %c0_i32, %arg1 : i32, i32, i32
  }
  func.func @transform_1(%arg0: i32, %arg1: i32) -> (i32, i32, i32) {
    %c0_i32 = arith.constant 0 : i32
    %c0_i32_0 = arith.constant 0 : i32
    %c0_i32_1 = arith.constant 0 : i32
    return %arg0, %c0_i32, %c0_i32_0 : i32, i32, i32
  }
  func.func @transform_2(%arg0: i32, %arg1: i32) -> (i32, i32, i32) {
    %c0_i32 = arith.constant 0 : i32
    %c0_i32_0 = arith.constant 0 : i32
    %c0_i32_1 = arith.constant 0 : i32
    return %arg0, %c0_i32, %c0_i32_0 : i32, i32, i32
  }
}

</mosaic_0001>

<llo_original>
// kernel: tpu_custom_call.1
$region0: #{tpu_custom_call.1}
  #allocation0 [shape = 'u32[]', space=smem, size = 0x4, offset = 0x4, fixed_abs, tag = 'smem constant byte address 0x4 - core index']
  #allocation1 [shape = 'u32[144,128]{1,0:T(1,128)}', space=vmem, size = 0x12000, scoped, tag = 'internal scratch']
  %s0 = inlined_call_operand.hbm [shape: f32[2,4,256], index: 0, kind: input, shape index: {}]
  %s1 = inlined_call_operand.vmem [shape: f32[2,4,1], index: 1, kind: output, shape index: {0}]
  %s2 = inlined_call_operand.hbm [shape: f32[2,4,4], index: 2, kind: output, shape index: {1}]
  %3 = xla_tuple %s1, %s2
  %s4 = sld [smem:[#allocation0]]
  $region53: #{tpu_custom_call.1} parent=0
    _
  %s6 = ssub.s32 1, %s4
  %s7 = scalar_select 0, %s6, %s4
  $region1: #{tpu_custom_call.1} parent=0
    #allocation2 [shape = 'u8[8192]{0}', space=vmem, size = 0x2000, scoped, tag = 'input window, operand 0']
    #allocation3 [shape = 's32[2]{0}', space=sflag, size = 0x8, scoped, tag = 'scoped memory for tpu_custom_call.1']
    #allocation4 [shape = 's32[2]{0}', space=sflag, size = 0x8, scoped, tag = 'scoped memory for tpu_custom_call.1']
    #allocation5 [shape = 'u8[4096]{0}', space=vmem, size = 0x1000, scoped, tag = 'output window, operand 1']
    %8 = vsyncpa [#allocation3], 0
    %s9 = scalar_lea.sflag [#allocation3], 1
    %10 = vsyncpa %s9, 0
    %11 = vsyncpa [#allocation4], 0
    %s12 = scalar_lea.sflag [#allocation4], 1
    %13 = vsyncpa %s12, 0
    loop: start=0, step=1, limit=4
    $region2: #{tpu_custom_call.1} parent=1 // loop_pre_header
      _
    $region3: #{tpu_custom_call.1} parent=1 // loop_header
      %s15 = sphi 0, %s19
      %p16 = scmp.ge.s32.totalorder %s15, 4
      %s22 = sphi 0, %s34
      %s23 = sphi 0, %s30
      %s24 = sphi 0, %s22
      %s25 = sphi 0, %s23
      %s26 = sphi 0, %s24
      %s27 = sphi 0, %s25
      %s39 = sphi 0, %s41
      %s42 = sphi 0, %s39
      %s43 = sphi 0, %s42
      %s59 = sphi 0, %s43
      %s65 = sphi 0, %s67
      %s68 = sphi 0, %s65
      %s69 = sphi 0, %s68
      %s85 = sphi 0, %s69
      %s91 = sphi 0, %s93
      %s94 = sphi 0, %s91
      %s95 = sphi 0, %s94
      %s111 = sphi 0, %s95
    $region4: #{tpu_custom_call.1} parent=1 // loop_header_branch
      %18 = sbr.rel (%p16) target = $region8
    $region5: #{tpu_custom_call.1} parent=1 // loop_body
      %s20 = ssub.s32 %s15, 1
      %s21 = ssub.s32 %s15, 2
      %s28 = sadd.s32 1, %s23
      %p29 = scmp.ge.s32.totalorder %s28, 1
      %s30 = scalar_select %p29, 0, %s28
      %s31 = sadd.s32 1, %s22
      %s32 = scalar_select %p29, %s31, %s22
      %p33 = scmp.ge.s32.totalorder %s32, 2
      %s34 = scalar_select %p33, 0, %s32
      %s35 = ssub.s32 %s22, %s34
      %s36 = ssub.s32 %s23, %s30
      %s37 = sor.u32 %s35, %s36
      %p38 = scmp.eq.s32.totalorder %s37, 0
      %s40 = sadd.s32 %s39, 1
      %s41 = scalar_select %p38, %s39, %s40
      %p44 = pneg %p38
      %p45 = scmp.eq.s32.totalorder %s15, 1
      %p46 = por %p44, %p45
      %p47 = scmp.ne.s32.totalorder %s39, %s42
      %p48 = scmp.eq.s32.totalorder %s15, 0
      %p49 = por %p47, %p48
      %p50 = scmp.ne.s32.totalorder %s39, %s42
      %p51 = scmp.eq.s32.totalorder %s20, 1
      %p52 = por %p50, %p51
      %p53 = scmp.ne.s32.totalorder %s42, %s43
      %p54 = scmp.eq.s32.totalorder %s20, 0
      %p55 = por %p53, %p54
      %p56 = scmp.ne.s32.totalorder %s42, %s43
      %p57 = scmp.eq.s32.totalorder %s21, 1
      %p58 = por %p56, %p57
      %p60 = scmp.ne.s32.totalorder %s43, %s59
      %p61 = scmp.eq.s32.totalorder %s21, 0
      %p62 = por %p60, %p61
      %s63 = ssub.s32 %s22, %s34
      %p64 = scmp.eq.s32.totalorder %s63, 0
      %s66 = sadd.s32 %s65, 1
      %s67 = scalar_select %p64, %s65, %s66
      %p70 = pneg %p64
      %p71 = scmp.eq.s32.totalorder %s15, 1
      %p72 = por %p70, %p71
      %p73 = scmp.ne.s32.totalorder %s65, %s68
      %p74 = scmp.eq.s32.totalorder %s15, 0
      %p75 = por %p73, %p74
      %p76 = scmp.ne.s32.totalorder %s65, %s68
      %p77 = scmp.eq.s32.totalorder %s20, 1
      %p78 = por %p76, %p77
      %p79 = scmp.ne.s32.totalorder %s68, %s69
      %p80 = scmp.eq.s32.totalorder %s20, 0
      %p81 = por %p79, %p80
      %p82 = scmp.ne.s32.totalorder %s68, %s69
      %p83 = scmp.eq.s32.totalorder %s21, 1
      %p84 = por %p82, %p83
      %p86 = scmp.ne.s32.totalorder %s69, %s85
      %p87 = scmp.eq.s32.totalorder %s21, 0
      %p88 = por %p86, %p87
      %s89 = ssub.s32 %s22, %s34
      %p90 = scmp.eq.s32.totalorder %s89, 0
      %s92 = sadd.s32 %s91, 1
      %s93 = scalar_select %p90, %s91, %s92
      %p96 = pneg %p90
      %p97 = scmp.eq.s32.totalorder %s15, 1
      %p98 = por %p96, %p97
      %p99 = scmp.ne.s32.totalorder %s91, %s94
      %p100 = scmp.eq.s32.totalorder %s15, 0
      %p101 = por %p99, %p100
      %p102 = scmp.ne.s32.totalorder %s91, %s94
      %p103 = scmp.eq.s32.totalorder %s20, 1
      %p104 = por %p102, %p103
      %p105 = scmp.ne.s32.totalorder %s94, %s95
      %p106 = scmp.eq.s32.totalorder %s20, 0
      %p107 = por %p105, %p106
      %p108 = scmp.ne.s32.totalorder %s94, %s95
      %p109 = scmp.eq.s32.totalorder %s21, 1
      %p110 = por %p108, %p109
      %p112 = scmp.ne.s32.totalorder %s95, %s111
      %p113 = scmp.eq.s32.totalorder %s21, 0
      %p114 = por %p112, %p113
      %p115 = scmp.le.s32.totalorder 1, %s15
      %p116 = scmp.lt.s32.totalorder %s15, 3
      %p117 = pnand %p115, %p116
      %p118 = pneg %p117
      // Predicated region
      $region9: #{tpu_custom_call.1} parent=5 // pred_check
        _
      $region10: #{tpu_custom_call.1} parent=5 // pred_check_branch
        %120 = sbr.rel (%p117) target = $region12
      $region11: #{tpu_custom_call.1} parent=5 // pred_region
        %s121 = ssub.s32 %s15, 1
      $region12: #{tpu_custom_call.1} parent=5 // pred_fallthru
        _
      %p122 = scmp.lt.s32.totalorder %s15, 2
      // Predicated region
      $region13: #{tpu_custom_call.1} parent=5 // pred_check
        %p123 = pneg %p122
      $region14: #{tpu_custom_call.1} parent=5 // pred_check_branch
        %125 = sbr.rel (%p123) target = $region16
      $region15: #{tpu_custom_call.1} parent=5 // pred_region
        // Predicated region
        $region17: #{tpu_custom_call.1} parent=15 // pred_check
          %p126 = pneg %p49
        $region18: #{tpu_custom_call.1} parent=15 // pred_check_branch
          %128 = sbr.rel (%p126) target = $region20
        $region19: #{tpu_custom_call.1} parent=15 // pred_region
          %s129 = sand.u32 %s39, 1
          %s130 = scalar_lea.sflag [#allocation3], %s129
          %s131 = sand.u32 %s39, 1
          %s132 = smul.addr %s131, 8
          %s133 = scalar_lea.vmem [#allocation2], %s132
          %s134 = smul.u32 2, %s23
          %s136 = ssub.s32 128, 128
          %137 = vsyncadd %s130, %s136
          %s138 = smul.addr %s22, 2
          %s139 = sadd.s32 %s134, %s138
          %s140 = smul.addr %s139, 64
          %s141 = scalar_lea.hbm %s0, %s140
          %s143 = sshll.u32 %s133, 4
          %s144 = int_to_ptr.vmem [resolvable:$true] %s143
          %146 = dma.hbm_to_vmem [thread:$0]  %s141, 128, %s144, %s130
        $region20: #{tpu_custom_call.1} parent=15 // pred_fallthru
          _
      $region16: #{tpu_custom_call.1} parent=5 // pred_fallthru
        _
      %p147 = scmp.le.s32.totalorder 1, %s15
      %p148 = scmp.lt.s32.totalorder %s15, 3
      %p149 = pnand %p147, %p148
      %p150 = pneg %p149
      // Predicated region
      $region21: #{tpu_custom_call.1} parent=5 // pred_check
        _
      $region22: #{tpu_custom_call.1} parent=5 // pred_check_branch
        %152 = sbr.rel (%p149) target = $region24
      $region23: #{tpu_custom_call.1} parent=5 // pred_region
        %s153 = ssub.s32 %s15, 1
        %s154 = sand.u32 %s42, 1
        %s155 = scalar_lea.sflag [#allocation3], %s154
        %s156 = sand.u32 %s42, 1
        %s157 = smul.addr %s156, 8
        %s158 = scalar_lea.vmem [#allocation2], %s157
        // Predicated region
        $region25: #{tpu_custom_call.1} parent=23 // pred_check
          %p159 = pneg %p55
        $region26: #{tpu_custom_call.1} parent=23 // pred_check_branch
          %161 = sbr.rel (%p159) target = $region28
        $region27: #{tpu_custom_call.1} parent=23 // pred_region
          %162 = dma.done %s155, 128
        $region28: #{tpu_custom_call.1} parent=23 // pred_fallthru
          _
        %s163 = sand.u32 %s42, 1
        %s164 = scalar_lea.sflag [#allocation3], %s163
        %s165 = sand.u32 %s42, 1
        %s166 = smul.addr %s165, 8
        %s167 = scalar_lea.vmem [#allocation2], %s166
        %p168 = pneg %p55
        %p169 = pneg %p52
        %p170 = pneg %p81
        %p171 = pneg %p78
        %p172 = scmp.lt.s32.totalorder %s24, 1
        %s173 = scalar_select %p172, %s24, 1
        %s174 = smul.addr %s173, 4
        %s175 = scalar_lea.vmem %s1, %s174
        %p176 = pneg %p107
        %p177 = pneg %p104
        %s178 = sand.u32 %s94, 1
        %s179 = scalar_lea.sflag [#allocation4], %s178
        %s180 = sand.u32 %s94, 1
        %s181 = smul.addr %s180, 4
        %s182 = scalar_lea.vmem [#allocation5], %s181
        %s183 = smul.u32 2, %s25
        %p184 = scmp.lt.s32.totalorder %s24, 1
        %s185 = scalar_select %p184, %s24, 1
        %s186 = smul.addr %s185, 4
        %s187 = scalar_lea.vmem %s1, %s186
        %p188 = scmp.eq.s32.totalorder %s25, 0
        // Predicated region
        $region29: #{tpu_custom_call.1} parent=23 // pred_check
          %p189 = pneg %p188
        $region30: #{tpu_custom_call.1} parent=23 // pred_check_branch
          %191 = sbr.rel (%p189) target = $region32
        $region31: #{tpu_custom_call.1} parent=23 // pred_region
          %vm192 = vcmask 3072
          %193 = vst.msk [vmem:[%s187] sm:$0xf] %vm192, 0.0
          %vm194 = vcmask 27648
          %195 = vst.msk [vmem:[%s182] sm:$0xf] %vm194, 0.0
        $region32: #{tpu_custom_call.1} parent=23 // pred_fallthru
          _
        %v196 = vld [vmem:[%s158] sm:$0xff]
        %v197 = vld [vmem:[%s187] sm:$0xf]
        %v199 = vcombine.high %v196, %v196
        %201 = vmatprep.subr.mxu0 0.0
        %202 = vmatpush1.msra.mxu0 1.0
        %203 = vmatprep.subr.mxu0 0.0
        %204 = vmatpush1.msra.mxu0 1.0
        %205 = vmatprep.subr.mxu0 0.0
        %206 = vmatpush1.msra.mxu0 1.0
        %207 = vmatprep.subr.mxu0 0.0
        %208 = vmatpush1.msra.mxu0 1.0
        %209 = vmatprep.subr.mxu0 0.0
        %210 = vmatpush1.msra.mxu0 1.0
        %211 = vmatprep.subr.mxu0 0.0
        %212 = vmatpush1.msra.mxu0 1.0
        %213 = vmatprep.subr.mxu0 0.0
        %214 = vmatpush1.msra.mxu0 1.0
        %215 = vmatprep.subr.mxu0 0.0
        %216 = vmatpush1.msra.mxu0 1.0
        %217 = vmatprep.subr.mxu0 0.0
        %218 = vmatpush1.msra.mxu0 1.0
        %219 = vmatprep.subr.mxu0 0.0
        %220 = vmatpush1.msra.mxu0 1.0
        %221 = vmatprep.subr.mxu0 0.0
        %222 = vmatpush1.msra.mxu0 1.0
        %223 = vmatprep.subr.mxu0 0.0
        %224 = vmatpush1.msra.mxu0 1.0
        %225 = vmatprep.subr.mxu0 0.0
        %226 = vmatpush1.msra.mxu0 1.0
        %227 = vmatprep.subr.mxu0 0.0
        %228 = vmatpush1.msra.mxu0 1.0
        %229 = vmatprep.subr.mxu0 0.0
        %230 = vmatpush1.msra.mxu0 1.0
        %231 = vmatprep.subr.mxu0 0.0
        %232 = vmatpush1.msra.mxu0 1.0
        %233 = vmatprep.subr.mxu0 0.0
        %234 = vmatpush2.msra.mxu0 1.0
        %235 = vmatprep.subr.mxu0 0.0
        %236 = vmatpush2.msra.mxu0 1.0
        %237 = vmatprep.subr.mxu0 0.0
        %238 = vmatpush2.msra.mxu0 1.0
        %239 = vmatprep.subr.mxu0 0.0
        %240 = vmatpush2.msra.mxu0 1.0
        %241 = vmatprep.subr.mxu0 0.0
        %242 = vmatpush2.msra.mxu0 1.0
        %243 = vmatprep.subr.mxu0 0.0
        %244 = vmatpush2.msra.mxu0 1.0
        %245 = vmatprep.subr.mxu0 0.0
        %246 = vmatpush2.msra.mxu0 1.0
        %247 = vmatprep.subr.mxu0 0.0
        %248 = vmatpush2.msra.mxu0 1.0
        %249 = vmatprep.subr.mxu0 0.0
        %250 = vmatpush2.msra.mxu0 1.0
        %251 = vmatprep.subr.mxu0 0.0
        %252 = vmatpush2.msra.mxu0 1.0
        %253 = vmatprep.subr.mxu0 0.0
        %254 = vmatpush2.msra.mxu0 1.0
        %255 = vmatprep.subr.mxu0 0.0
        %256 = vmatpush2.msra.mxu0 1.0
        %257 = vmatprep.subr.mxu0 0.0
        %258 = vmatpush2.msra.mxu0 1.0
        %259 = vmatprep.subr.mxu0 0.0
        %260 = vmatpush2.msra.mxu0 1.0
        %261 = vmatprep.subr.mxu0 0.0
        %262 = vmatpush2.msra.mxu0 1.0
        %263 = vmatprep.subr.mxu0 0.0
        %264 = vmatpush2.msra.mxu0 1.0
        %265 = vmatprep.mubr.f32.mxu0 %v199
        %266 = vmatmul.mubr.f32.gmra.mxu0 %v196
        %v267 = vpop.f32.mrf.mxu0
        %v268 = vadd.f32 0.0, %v267
        %v269 = vpop.f32.mrf.mxu0
        %270 = vdwg.mxu0
        %v271 = vadd.f32 %v197, %v268
        %vm272 = vcmask 3072
        %273 = vst.msk [vmem:[%s187] sm:$0xf] %vm272, %v271
        %v274 = vld [vmem:[%s182] sm:$0xf]
        %275 = vmatprep.subr.mxu0 0.0
        %276 = vmatpush1.xpose.msra.mxu0 0.0
        %277 = vmatprep.subr.mxu0 0.0
        %278 = vmatpush1.xpose.msra.mxu0 0.0
        %279 = vmatprep.subr.mxu0 0.0
        %280 = vmatpush1.xpose.msra.mxu0 0.0
        %281 = vmatprep.subr.mxu0 0.0
        %282 = vmatpush1.xpose.msra.mxu0 0.0
        %283 = vmatprep.subr.mxu0 0.0
        %284 = vmatpush1.xpose.msra.mxu0 0.0
        %285 = vmatprep.subr.mxu0 0.0
        %286 = vmatpush1.xpose.msra.mxu0 0.0
        %287 = vmatprep.subr.mxu0 0.0
        %288 = vmatpush1.xpose.msra.mxu0 0.0
        %289 = vmatprep.subr.mxu0 0.0
        %290 = vmatpush1.xpose.msra.mxu0 0.0
        %291 = vmatprep.subr.mxu0 0.0
        %292 = vmatpush1.xpose.msra.mxu0 0.0
        %293 = vmatprep.subr.mxu0 0.0
        %294 = vmatpush1.xpose.msra.mxu0 0.0
        %295 = vmatprep.subr.mxu0 0.0
        %296 = vmatpush1.xpose.msra.mxu0 0.0
        %297 = vmatprep.subr.mxu0 0.0
        %298 = vmatpush1.xpose.msra.mxu0 0.0
        %299 = vmatprep.subr.mxu0 0.0
        %300 = vmatpush1.xpose.msra.mxu0 0.0
        %301 = vmatprep.subr.mxu0 0.0
        %302 = vmatpush1.xpose.msra.mxu0 0.0
        %303 = vmatprep.subr.mxu0 0.0
        %304 = vmatpush1.xpose.msra.mxu0 0.0
        %305 = vmatprep.subr.mxu0 %v199
        %306 = vmatpush1.xpose.msra.mxu0 %v196
        %307 = vmatprep.subr.mxu0 0.0
        %308 = vmatpush2.xpose.msra.mxu0 0.0
        %309 = vmatprep.subr.mxu0 0.0
        %310 = vmatpush2.xpose.msra.mxu0 0.0
        %311 = vmatprep.subr.mxu0 0.0
        %312 = vmatpush2.xpose.msra.mxu0 0.0
        %313 = vmatprep.subr.mxu0 0.0
        %314 = vmatpush2.xpose.msra.mxu0 0.0
        %315 = vmatprep.subr.mxu0 0.0
        %316 = vmatpush2.xpose.msra.mxu0 0.0
        %317 = vmatprep.subr.mxu0 0.0
        %318 = vmatpush2.xpose.msra.mxu0 0.0
        %319 = vmatprep.subr.mxu0 0.0
        %320 = vmatpush2.xpose.msra.mxu0 0.0
        %321 = vmatprep.subr.mxu0 0.0
        %322 = vmatpush2.xpose.msra.mxu0 0.0
        %323 = vmatprep.subr.mxu0 0.0
        %324 = vmatpush2.xpose.msra.mxu0 0.0
        %325 = vmatprep.subr.mxu0 0.0
        %326 = vmatpush2.xpose.msra.mxu0 0.0
        %327 = vmatprep.subr.mxu0 0.0
        %328 = vmatpush2.xpose.msra.mxu0 0.0
        %329 = vmatprep.subr.mxu0 0.0
        %330 = vmatpush2.xpose.msra.mxu0 0.0
        %331 = vmatprep.subr.mxu0 0.0
        %332 = vmatpush2.xpose.msra.mxu0 0.0
        %333 = vmatprep.subr.mxu0 0.0
        %334 = vmatpush2.xpose.msra.mxu0 0.0
        %335 = vmatprep.subr.mxu0 0.0
        %336 = vmatpush2.xpose.msra.mxu0 0.0
        %337 = vmatprep.subr.mxu0 0.0
        %338 = vmatpush2.xpose.msra.mxu0 0.0
        %339 = vmatprep.mubr.f32.mxu0 %v199
        %340 = vmatmul.mubr.f32.gmra.mxu0 %v196
        %v341 = vpop.f32.mrf.mxu0
        %v342 = vadd.f32 0.0, %v341
        %v343 = vpop.f32.mrf.mxu0
        %344 = vdwg.mxu0
        %v345 = vadd.f32 %v274, %v342
        %vm346 = vcmask 27648
        %347 = vst.msk [vmem:[%s182] sm:$0xf] %vm346, %v345
        %p348 = scmp.lt.s32.totalorder %s24, 1
        %s349 = scalar_select %p348, %s24, 1
        %s350 = smul.addr %s349, 4
        %s351 = scalar_lea.vmem %s1, %s350
        %s352 = sand.u32 %s94, 1
        %s353 = scalar_lea.sflag [#allocation4], %s352
        %s354 = sand.u32 %s94, 1
        %s355 = smul.addr %s354, 4
        %s356 = scalar_lea.vmem [#allocation5], %s355
        // Predicated region
        $region33: #{tpu_custom_call.1} parent=23 // pred_check
          %p357 = pneg %p78
        $region34: #{tpu_custom_call.1} parent=23 // pred_check_branch
          %359 = sbr.rel (%p357) target = $region36
        $region35: #{tpu_custom_call.1} parent=23 // pred_region
          _
        $region36: #{tpu_custom_call.1} parent=23 // pred_fallthru
          _
        // Predicated region
        $region37: #{tpu_custom_call.1} parent=23 // pred_check
          %p360 = pneg %p104
        $region38: #{tpu_custom_call.1} parent=23 // pred_check_branch
          %362 = sbr.rel (%p360) target = $region40
        $region39: #{tpu_custom_call.1} parent=23 // pred_region
          %s364 = ssub.s32 64, 64
          %365 = vsyncadd %s353, %s364
          %s366 = smul.addr %s24, 64
          %s367 = scalar_lea.hbm %s2, %s366
          %s369 = sshll.u32 %s356, 4
          %s370 = int_to_ptr.vmem [resolvable:$true] %s369
          %372 = dma.vmem_to_hbm [thread:$0]  %s370, 64, %s367, %s353
        $region40: #{tpu_custom_call.1} parent=23 // pred_fallthru
          _
      $region24: #{tpu_custom_call.1} parent=5 // pred_fallthru
        _
      %p373 = scmp.le.s32.totalorder 2, %s15
      // Predicated region
      $region41: #{tpu_custom_call.1} parent=5 // pred_check
        %p374 = pneg %p373
      $region42: #{tpu_custom_call.1} parent=5 // pred_check_branch
        %376 = sbr.rel (%p374) target = $region44
      $region43: #{tpu_custom_call.1} parent=5 // pred_region
        %s377 = ssub.s32 %s15, 2
        // Predicated region
        $region45: #{tpu_custom_call.1} parent=43 // pred_check
          %p378 = pneg %p84
        $region46: #{tpu_custom_call.1} parent=43 // pred_check_branch
          %380 = sbr.rel (%p378) target = $region48
        $region47: #{tpu_custom_call.1} parent=43 // pred_region
          %p381 = scmp.lt.s32.totalorder %s26, 1
          %s382 = scalar_select %p381, %s26, 1
          %s383 = smul.addr %s382, 4
          %s384 = scalar_lea.vmem %s1, %s383
        $region48: #{tpu_custom_call.1} parent=43 // pred_fallthru
          _
        // Predicated region
        $region49: #{tpu_custom_call.1} parent=43 // pred_check
          %p385 = pneg %p110
        $region50: #{tpu_custom_call.1} parent=43 // pred_check_branch
          %387 = sbr.rel (%p385) target = $region52
        $region51: #{tpu_custom_call.1} parent=43 // pred_region
          %s388 = sand.u32 %s95, 1
          %s389 = scalar_lea.sflag [#allocation4], %s388
          %s390 = sand.u32 %s95, 1
          %s391 = smul.addr %s390, 4
          %s392 = scalar_lea.vmem [#allocation5], %s391
          %393 = dma.done %s389, 64
        $region52: #{tpu_custom_call.1} parent=43 // pred_fallthru
          _
      $region44: #{tpu_custom_call.1} parent=5 // pred_fallthru
        _
    $region6: #{tpu_custom_call.1} parent=1 // loop_footer
      %s19 = sadd.s32 1, %s15
    $region7: #{tpu_custom_call.1} parent=1 // loop_footer_branch
      %14 = sbr.rel target = $region3
    $region8: #{tpu_custom_call.1} parent=1 // loop_exit
      _
    %394 = vsyncpa [#allocation3], 1
    %s395 = scalar_lea.sflag [#allocation3], 1
    %396 = vsyncpa %s395, 1
    %397 = vsyncpa [#allocation4], 1
    %s398 = scalar_lea.sflag [#allocation4], 1
    %399 = vsyncpa %s398, 1

</llo_original>
